<compile_context>
chip_gen: v6e
topology: v6e:2x2x1
jax: 0.10.0
libtpu: 0.0.40
codegen_flags: <defaults>
</compile_context>

<pallas_src>
import math
import jax
import jax.numpy as jnp
from jax.experimental import pallas as pl
from jax.experimental.pallas import tpu as pltpu

EPS = 1e-6  # Used by PyTorch EMALoss only in backward; kept for parity.


def _mine_stats_kernel(x_ref, z_ref, zm_ref,
                       w1x_ref, w1z_ref, b1_ref,
                       w2_ref, b2_ref, w3r_ref, b3_ref,
                       out_ref,
                       sum_ref, m_ref, l_ref):
    """One batch tile of the MINE statistics network.

    Streamed per grid step (VMEM):
      x_ref:  [TB, Dx]   z_ref: [TB, Dz]   zm_ref: [TB, Dz]   (marginal z)
    Resident weights (VMEM, constant index_map):
      w1x: [Dx, H]  w1z: [Dz, H]  b1: [1, H]
      w2:  [H, H]   b2: [1, H]
      w3r: [1, H]   b3: [1, 1]
    Output (SMEM, written at last grid step):
      out_ref: [2] -> [ sum(T(x, z)),  logsumexp(T(x, z_marg)) ]
    Scratch (VMEM, persistent across grid steps):
      sum_ref/m_ref/l_ref: [1, 1] running sum / running max / running exp-sum.
    """
    step = pl.program_id(0)

    @pl.when(step == 0)
    def _init():
        sum_ref[...] = jnp.zeros_like(sum_ref)
        m_ref[...] = jnp.full_like(m_ref, -jnp.inf)
        l_ref[...] = jnp.zeros_like(l_ref)

    cdt = w2_ref.dtype  # matmul compute dtype (e.g. bf16); accumulation stays f32

    # Layer 1: shared x contribution computed once, reused by both branches.
    xw = jnp.dot(x_ref[...], w1x_ref[...], preferred_element_type=jnp.float32)
    zw_j = jnp.dot(z_ref[...], w1z_ref[...], preferred_element_type=jnp.float32)
    zw_m = jnp.dot(zm_ref[...], w1z_ref[...], preferred_element_type=jnp.float32)
    b1 = b1_ref[...]
    h1_j = jnp.maximum(xw + zw_j + b1, 0.0).astype(cdt)   # [TB, H]
    h1_m = jnp.maximum(xw + zw_m + b1, 0.0).astype(cdt)   # [TB, H]

    # Layer 2: stack joint/marginal rows -> a single MXU pass over [2*TB, H].
    h1 = jnp.concatenate([h1_j, h1_m], axis=0)             # [2*TB, H]
    h2 = jnp.dot(h1, w2_ref[...], preferred_element_type=jnp.float32) + b2_ref[...]
    h2 = jnp.maximum(h2, 0.0)                               # [2*TB, H] f32

    # Layer 3 on the VPU/XLU: t = sum(h2 * w3_row, -1) + b3  (avoids an N=1 MXU matmul).
    t = jnp.sum(h2 * w3r_ref[...], axis=-1, keepdims=True) + b3_ref[...]   # [2*TB, 1]

    tb = x_ref.shape[0]
    t_joint = t[:tb]          # [TB, 1]
    t_marg = t[tb:]           # [TB, 1]

    # Running sum of joint scores.
    sum_ref[...] = sum_ref[...] + jnp.sum(t_joint)

    # Online (streaming) logsumexp over the marginal scores.
    m_old = m_ref[...]
    m_new = jnp.maximum(m_old, jnp.max(t_marg))
    l_ref[...] = l_ref[...] * jnp.exp(m_old - m_new) + jnp.sum(jnp.exp(t_marg - m_new))
    m_ref[...] = m_new

    @pl.when(step == pl.num_programs(0) - 1)
    def _finalize():
        out_ref[0] = jnp.sum(sum_ref[...])
        out_ref[1] = jnp.sum(m_ref[...] + jnp.log(l_ref[...]))


def _pick_batch_tile(B, Dx, Dz, H, bytes_in, max_tile=2048, budget_bytes=8 << 20):
    """Largest batch tile that is a multiple of 8 dividing B (or == B) and keeps the
    double-buffered streamed inputs + per-tile activations within a conservative
    VMEM budget (safe on v7x's 64 MiB as well as v5e/v6e's 128 MiB)."""
    # streamed rows x 2 pipeline buffers + f32 activation rows (h1_j/h1_m/h2/t, 2x batch)
    per_row = 2 * (Dx + 2 * Dz) * bytes_in + (8 * H + 16) * 4
    cap = max(8, budget_bytes // max(per_row, 1))
    cap = min(cap, max_tile)
    if B <= cap:
        return B                      # whole batch as one block (block == full dim is legal)
    cap = (cap // 8) * 8
    for tb in range(cap, 7, -8):      # tile must be a multiple of 8 and divide B
        if B % tb == 0:
            return tb
    return B  # fallback for awkward B: single block (may be VMEM-heavy)


def mine_stats(x, z, z_marg, params, *, matmul_dtype=jnp.bfloat16):
    """Pallas wrapper. Returns float32 [2] = [sum(T(x,z)), logsumexp(T(x,z_marg))]."""
    w1, b1, w2, b2, w3, b3 = params
    B, Dx = x.shape
    Dz = z.shape[1]
    H = w1.shape[1]

    # Split W1 so concat(x, z) never exists and x @ W1x is shared by both branches.
    w1x = w1[:Dx].astype(matmul_dtype)
    w1z = w1[Dx:].astype(matmul_dtype)
    w2c = w2.astype(matmul_dtype)
    w3r = jnp.reshape(w3, (1, H)).astype(jnp.float32)      # used on the VPU in f32
    b1r = jnp.reshape(b1, (1, H)).astype(jnp.float32)
    b2r = jnp.reshape(b2, (1, H)).astype(jnp.float32)
    b3r = jnp.reshape(b3, (1, 1)).astype(jnp.float32)

    xc = x.astype(matmul_dtype)
    zc = z.astype(matmul_dtype)
    zmc = z_marg.astype(matmul_dtype)

    tb = _pick_batch_tile(B, Dx, Dz, H, jnp.dtype(matmul_dtype).itemsize)
    grid = (pl.cdiv(B, tb),)

    def stream(d):
        return pl.BlockSpec((tb, d), lambda i: (i, 0))

    def resident(shape):
        return pl.BlockSpec(shape, lambda i: tuple(0 for _ in shape))

    return pl.pallas_call(
        _mine_stats_kernel,
        out_shape=jax.ShapeDtypeStruct((2,), jnp.float32),
        grid=grid,
        in_specs=[stream(Dx), stream(Dz), stream(Dz),
                  resident((Dx, H)), resident((Dz, H)), resident((1, H)),
                  resident((H, H)), resident((1, H)), resident((1, H)),
                  resident((1, 1))],
        out_specs=pl.BlockSpec(memory_space=pltpu.MemorySpace.SMEM),
        scratch_shapes=[pltpu.VMEM((1, 1), jnp.float32),   # running sum(T_joint)
                        pltpu.VMEM((1, 1), jnp.float32),   # running max of T_marg
                        pltpu.VMEM((1, 1), jnp.float32)],  # running exp-sum of T_marg
        compiler_params=pltpu.CompilerParams(
            dimension_semantics=("arbitrary",)),
    )(xc, zc, zmc, w1x, w1z, b1r, w2c, b2r, w3r, b3r)


def mine_forward(x, z, params, running_mean, *, loss="mine", alpha=0.01,
                 lam=0.1, C=0.0, z_marg=None, perm_key=None,
                 matmul_dtype=jnp.bfloat16):
    """Reproduces Mine.forward semantics. Returns (loss_value, new_running_mean)."""
    B = x.shape[0]
    if z_marg is None:
        if perm_key is None:
            perm_key = jax.random.PRNGKey(1)
        z_marg = z[jax.random.permutation(perm_key, B)]   # z[randperm(B)]

    stats = mine_stats(x.astype(jnp.float32), z.astype(jnp.float32),
                       z_marg.astype(jnp.float32), params,
                       matmul_dtype=matmul_dtype)
    mean_joint = stats[0] / B                     # stats_network(x, z).mean()
    lse_marg = stats[1]                           # logsumexp(t_marg, 0)
    log_b = math.log(B)

    if loss == "mine":
        # ema_loss: t_exp = exp(logsumexp(t_marg) - log(B))  (detached)
        t_exp = jax.lax.stop_gradient(jnp.exp(lse_marg - log_b))
        new_running_mean = jnp.where(
            running_mean == 0.0, t_exp, alpha * t_exp + (1.0 - alpha) * running_mean)
        # EMALoss.forward: log(mean(exp(t_marg))) == logsumexp - log(B)
        second_term = lse_marg - log_b
    elif loss == "fdiv":
        # mean(exp(t_marg - 1)) == exp(logsumexp - log(B) - 1)
        second_term = jnp.exp(lse_marg - log_b - 1.0)
        new_running_mean = running_mean
    elif loss == "mine_biased":
        second_term = lse_marg - log_b
        new_running_mean = running_mean
    else:
        raise ValueError(f"unknown loss {loss}")

    out = -mean_joint + second_term + lam * (second_term - C) ** 2
    return out, new_running_mean


def init_params(key, d_in, hidden):
    """Stats-network parameters (Linear->ReLU->Linear->ReLU->Linear)."""
    k1, k2, k3 = jax.random.split(key, 3)
    w1 = jax.random.normal(k1, (d_in, hidden), jnp.float32) / jnp.sqrt(d_in)
    b1 = jnp.zeros((1, hidden), jnp.float32)
    w2 = jax.random.normal(k2, (hidden, hidden), jnp.float32) / jnp.sqrt(hidden)
    b2 = jnp.zeros((1, hidden), jnp.float32)
    w3 = jax.random.normal(k3, (hidden, 1), jnp.float32) / jnp.sqrt(hidden)
    b3 = jnp.zeros((1, 1), jnp.float32)
    return (w1, b1, w2, b2, w3, b3)


def _mine_stats_ref(x, z, z_marg, params, matmul_dtype):
    """Plain-JAX reference of the kernel's [sum_joint, logsumexp_marg] output."""
    w1, b1, w2, b2, w3, b3 = params

    def mlp(xz):
        h = jnp.maximum(jnp.dot(xz.astype(matmul_dtype), w1.astype(matmul_dtype),
                                preferred_element_type=jnp.float32) + b1, 0.0)
        h = jnp.maximum(jnp.dot(h.astype(matmul_dtype), w2.astype(matmul_dtype),
                                preferred_element_type=jnp.float32) + b2, 0.0)
        return jnp.dot(h, w3.astype(jnp.float32),
                       preferred_element_type=jnp.float32) + b3

    t_j = mlp(jnp.concatenate([x, z], axis=-1))
    t_m = mlp(jnp.concatenate([x, z_marg], axis=-1))
    m = jnp.max(t_m)
    return jnp.stack([jnp.sum(t_j), m + jnp.log(jnp.sum(jnp.exp(t_m - m)))])


if __name__ == "__main__":
    # Small demo shapes; hidden dim lane-aligned to 128 per the perf review.
    B, Dx, Dz, H = 8, 16, 16, 128
    key = jax.random.PRNGKey(0)
    kx, kz, kp = jax.random.split(key, 3)

    x = jax.random.normal(kx, (B, Dx), jnp.float32)
    z = jax.random.normal(kz, (B, Dz), jnp.float32)
    params = init_params(kp, Dx + Dz, H)

    # Correctness check of the kernel's statistics against a plain-JAX reference
    # (same bf16 matmul inputs, loose tolerance for accumulation-order differences).
    perm_key = jax.random.PRNGKey(1)
    z_marg = z[jax.random.permutation(perm_key, B)]
    stats_kernel = mine_stats(x, z, z_marg, params, matmul_dtype=jnp.bfloat16)
    stats_ref = _mine_stats_ref(x, z, z_marg, params, jnp.bfloat16)
    jax.block_until_ready(stats_kernel)
    assert bool(jnp.all(jnp.isfinite(stats_kernel)))
    assert bool(jnp.all(jnp.abs(stats_kernel - stats_ref) <= 5e-2 + 5e-2 * jnp.abs(stats_ref)))

    running_mean = jnp.float32(0.0)
    loss_val, running_mean = mine_forward(
        x, z, params, running_mean, loss="mine", alpha=0.01, lam=0.1, C=0.0,
        perm_key=perm_key)
    jax.block_until_ready(loss_val)
    jax.block_until_ready(running_mean)

    assert loss_val.shape == () and running_mean.shape == ()
    assert bool(jnp.isfinite(loss_val)) and bool(jnp.isfinite(running_mean))
    print("KERNEL_OK")
</pallas_src>

<mosaic_0001>
module attributes {stable_mosaic.version = 11 : i64} {
  func.func @_mine_stats_kernel(%arg0: i32, %arg1: memref<8x16xbf16, #tpu.memory_space<vmem>>, %arg2: memref<8x16xbf16, #tpu.memory_space<vmem>>, %arg3: memref<8x16xbf16, #tpu.memory_space<vmem>>, %arg4: memref<16x128xbf16, #tpu.memory_space<vmem>>, %arg5: memref<16x128xbf16, #tpu.memory_space<vmem>>, %arg6: memref<1x128xf32, #tpu.memory_space<vmem>>, %arg7: memref<128x128xbf16, #tpu.memory_space<vmem>>, %arg8: memref<1x128xf32, #tpu.memory_space<vmem>>, %arg9: memref<1x128xf32, #tpu.memory_space<vmem>>, %arg10: memref<1x1xf32, #tpu.memory_space<vmem>>, %arg11: memref<2xf32, #tpu.memory_space<smem>>, %arg12: memref<1x1xf32, #tpu.memory_space<vmem>>, %arg13: memref<1x1xf32, #tpu.memory_space<vmem>>, %arg14: memref<1x1xf32, #tpu.memory_space<vmem>>) attributes {dimension_semantics = [#tpu.dimension_semantics<arbitrary>], iteration_bounds = array<i64: 1>, scalar_prefetch = 0 : i64, scratch_operands = 3 : i64, tpu.core_type = #tpu.core_type<tc>, window_params = [{transform_indices = @transform_0, window_bounds = array<i64: 8, 16>}, {transform_indices = @transform_1, window_bounds = array<i64: 8, 16>}, {transform_indices = @transform_2, window_bounds = array<i64: 8, 16>}, {pipeline_mode = #tpu.pipeline_mode<synchronous>, transform_indices = @transform_3, window_bounds = array<i64: 16, 128>}, {pipeline_mode = #tpu.pipeline_mode<synchronous>, transform_indices = @transform_4, window_bounds = array<i64: 16, 128>}, {pipeline_mode = #tpu.pipeline_mode<synchronous>, transform_indices = @transform_5, window_bounds = array<i64: 1, 128>}, {pipeline_mode = #tpu.pipeline_mode<synchronous>, transform_indices = @transform_6, window_bounds = array<i64: 128, 128>}, {pipeline_mode = #tpu.pipeline_mode<synchronous>, transform_indices = @transform_7, window_bounds = array<i64: 1, 128>}, {pipeline_mode = #tpu.pipeline_mode<synchronous>, transform_indices = @transform_8, window_bounds = array<i64: 1, 128>}, {pipeline_mode = #tpu.pipeline_mode<synchronous>, transform_indices = @transform_9, window_bounds = array<i64: 1, 1>}, {transform_indices = @transform_10, window_bounds = array<i64: 2>}]} {
    %c0_i32 = arith.constant 0 : i32
    %0 = arith.cmpi eq, %arg0, %c0_i32 : i32
    %1 = arith.extui %0 : i1 to i32
    %c0_i32_0 = arith.constant 0 : i32
    %2 = arith.cmpi ne, %1, %c0_i32_0 : i32
    scf.if %2 {
      %cst_46 = arith.constant 0.000000e+00 : f32
      %76 = vector.broadcast %cst_46 : f32 to vector<1x1xf32>
      %c0_47 = arith.constant 0 : index
      %c0_48 = arith.constant 0 : index
      %77 = vector.load %arg12[%c0_47, %c0_48] : memref<1x1xf32, #tpu.memory_space<vmem>>, vector<1x1xf32>
      tpu.vector_store %arg12[%c0_47, %c0_48], %76 {strides = array<i32>} : memref<1x1xf32, #tpu.memory_space<vmem>>, vector<1x1xf32>,
      %cst_49 = arith.constant 0xFF800000 : f32
      %78 = vector.broadcast %cst_49 : f32 to vector<1x1xf32>
      %c0_50 = arith.constant 0 : index
      %c0_51 = arith.constant 0 : index
      %79 = vector.load %arg13[%c0_50, %c0_51] : memref<1x1xf32, #tpu.memory_space<vmem>>, vector<1x1xf32>
      tpu.vector_store %arg13[%c0_50, %c0_51], %78 {strides = array<i32>} : memref<1x1xf32, #tpu.memory_space<vmem>>, vector<1x1xf32>,
      %cst_52 = arith.constant 0.000000e+00 : f32
      %80 = vector.broadcast %cst_52 : f32 to vector<1x1xf32>
      %c0_53 = arith.constant 0 : index
      %c0_54 = arith.constant 0 : index
      %81 = vector.load %arg14[%c0_53, %c0_54] : memref<1x1xf32, #tpu.memory_space<vmem>>, vector<1x1xf32>
      tpu.vector_store %arg14[%c0_53, %c0_54], %80 {strides = array<i32>} : memref<1x1xf32, #tpu.memory_space<vmem>>, vector<1x1xf32>,
    } else {
    }
    %c0 = arith.constant 0 : index
    %c0_1 = arith.constant 0 : index
    %3 = vector.load %arg1[%c0, %c0_1] : memref<8x16xbf16, #tpu.memory_space<vmem>>, vector<8x16xbf16>
    %c0_2 = arith.constant 0 : index
    %c0_3 = arith.constant 0 : index
    %4 = vector.load %arg4[%c0_2, %c0_3] : memref<16x128xbf16, #tpu.memory_space<vmem>>, vector<16x128xbf16>
    %cst = arith.constant dense<0.000000e+00> : vector<8x128xf32>
    %5 = tpu.matmul %3, %4, %cst {dimension_numbers = #tpu.dot_dimension_numbers<[1], [0], [0], [1], [0, 0, 1, 1], [], []>} : vector<8x16xbf16>, vector<16x128xbf16>, vector<8x128xf32> -> vector<8x128xf32>
    %c0_4 = arith.constant 0 : index
    %c0_5 = arith.constant 0 : index
    %6 = vector.load %arg2[%c0_4, %c0_5] : memref<8x16xbf16, #tpu.memory_space<vmem>>, vector<8x16xbf16>
    %c0_6 = arith.constant 0 : index
    %c0_7 = arith.constant 0 : index
    %7 = vector.load %arg5[%c0_6, %c0_7] : memref<16x128xbf16, #tpu.memory_space<vmem>>, vector<16x128xbf16>
    %cst_8 = arith.constant dense<0.000000e+00> : vector<8x128xf32>
    %8 = tpu.matmul %6, %7, %cst_8 {dimension_numbers = #tpu.dot_dimension_numbers<[1], [0], [0], [1], [0, 0, 1, 1], [], []>} : vector<8x16xbf16>, vector<16x128xbf16>, vector<8x128xf32> -> vector<8x128xf32>
    %c0_9 = arith.constant 0 : index
    %c0_10 = arith.constant 0 : index
    %9 = vector.load %arg3[%c0_9, %c0_10] : memref<8x16xbf16, #tpu.memory_space<vmem>>, vector<8x16xbf16>
    %c0_11 = arith.constant 0 : index
    %c0_12 = arith.constant 0 : index
    %10 = vector.load %arg5[%c0_11, %c0_12] : memref<16x128xbf16, #tpu.memory_space<vmem>>, vector<16x128xbf16>
    %cst_13 = arith.constant dense<0.000000e+00> : vector<8x128xf32>
    %11 = tpu.matmul %9, %10, %cst_13 {dimension_numbers = #tpu.dot_dimension_numbers<[1], [0], [0], [1], [0, 0, 1, 1], [], []>} : vector<8x16xbf16>, vector<16x128xbf16>, vector<8x128xf32> -> vector<8x128xf32>
    %c0_14 = arith.constant 0 : index
    %c0_15 = arith.constant 0 : index
    %12 = vector.load %arg6[%c0_14, %c0_15] : memref<1x128xf32, #tpu.memory_space<vmem>>, vector<1x128xf32>
    %13 = arith.addf %5, %8 : vector<8x128xf32>
    %14 = vector.broadcast %12 : vector<1x128xf32> to vector<8x128xf32>
    %15 = arith.addf %13, %14 : vector<8x128xf32>
    %cst_16 = arith.constant 0.000000e+00 : f32
    %16 = vector.broadcast %cst_16 : f32 to vector<8x128xf32>
    %17 = arith.maximumf %15, %16 : vector<8x128xf32>
    %18 = arith.truncf %17 : vector<8x128xf32> to vector<8x128xbf16>
    %19 = arith.addf %5, %11 : vector<8x128xf32>
    %20 = vector.broadcast %12 : vector<1x128xf32> to vector<8x128xf32>
    %21 = arith.addf %19, %20 : vector<8x128xf32>
    %cst_17 = arith.constant 0.000000e+00 : f32
    %22 = vector.broadcast %cst_17 : f32 to vector<8x128xf32>
    %23 = arith.maximumf %21, %22 : vector<8x128xf32>
    %24 = arith.truncf %23 : vector<8x128xf32> to vector<8x128xbf16>
    %25 = tpu.concatenate %18, %24 in 0 : vector<8x128xbf16>, vector<8x128xbf16> -> vector<16x128xbf16>
    %c0_18 = arith.constant 0 : index
    %c0_19 = arith.constant 0 : index
    %26 = vector.load %arg7[%c0_18, %c0_19] : memref<128x128xbf16, #tpu.memory_space<vmem>>, vector<128x128xbf16>
    %cst_20 = arith.constant dense<0.000000e+00> : vector<16x128xf32>
    %27 = tpu.matmul %25, %26, %cst_20 {dimension_numbers = #tpu.dot_dimension_numbers<[1], [0], [0], [1], [0, 0, 1, 1], [], []>} : vector<16x128xbf16>, vector<128x128xbf16>, vector<16x128xf32> -> vector<16x128xf32>
    %c0_21 = arith.constant 0 : index
    %c0_22 = arith.constant 0 : index
    %28 = vector.load %arg8[%c0_21, %c0_22] : memref<1x128xf32, #tpu.memory_space<vmem>>, vector<1x128xf32>
    %29 = vector.broadcast %28 : vector<1x128xf32> to vector<16x128xf32>
    %30 = arith.addf %27, %29 : vector<16x128xf32>
    %cst_23 = arith.constant 0.000000e+00 : f32
    %31 = vector.broadcast %cst_23 : f32 to vector<16x128xf32>
    %32 = arith.maximumf %30, %31 : vector<16x128xf32>
    %c0_24 = arith.constant 0 : index
    %c0_25 = arith.constant 0 : index
    %33 = vector.load %arg9[%c0_24, %c0_25] : memref<1x128xf32, #tpu.memory_space<vmem>>, vector<1x128xf32>
    %34 = vector.broadcast %33 : vector<1x128xf32> to vector<16x128xf32>
    %35 = arith.mulf %32, %34 : vector<16x128xf32>
    %cst_26 = arith.constant dense<0.000000e+00> : vector<16xf32>
    %36 = vector.multi_reduction <add>, %35, %cst_26 [1] : vector<16x128xf32> to vector<16xf32>
    %37 = vector.shape_cast %36 : vector<16xf32> to vector<16x1xf32>
    %c0_27 = arith.constant 0 : index
    %c0_28 = arith.constant 0 : index
    %38 = vector.load %arg10[%c0_27, %c0_28] : memref<1x1xf32, #tpu.memory_space<vmem>>, vector<1x1xf32>
    %39 = vector.broadcast %38 : vector<1x1xf32> to vector<16x1xf32>
    %40 = arith.addf %37, %39 : vector<16x1xf32>
    %41 = vector.extract_strided_slice %40 {offsets = [0, 0], sizes = [8, 1], strides = [1, 1]} : vector<16x1xf32> to vector<8x1xf32>
    %42 = vector.extract_strided_slice %40 {offsets = [8, 0], sizes = [8, 1], strides = [1, 1]} : vector<16x1xf32> to vector<8x1xf32>
    %c0_29 = arith.constant 0 : index
    %c0_30 = arith.constant 0 : index
    %43 = vector.load %arg12[%c0_29, %c0_30] : memref<1x1xf32, #tpu.memory_space<vmem>>, vector<1x1xf32>
    %44 = vector.shape_cast %41 : vector<8x1xf32> to vector<1x8x1xf32>
    %cst_31 = arith.constant dense<0.000000e+00> : vector<1xf32>
    %45 = vector.multi_reduction <add>, %44, %cst_31 [1, 2] : vector<1x8x1xf32> to vector<1xf32>
    %46 = vector.shape_cast %45 : vector<1xf32> to vector<1x1x1xf32>
    %47 = vector.extract %46[0, 0, 0] : f32 from vector<1x1x1xf32>
    %48 = vector.broadcast %47 : f32 to vector<1x1xf32>
    %49 = arith.addf %43, %48 : vector<1x1xf32>
    %c0_32 = arith.constant 0 : index
    %c0_33 = arith.constant 0 : index
    %50 = vector.load %arg12[%c0_32, %c0_33] : memref<1x1xf32, #tpu.memory_space<vmem>>, vector<1x1xf32>
    tpu.vector_store %arg12[%c0_32, %c0_33], %49 {strides = array<i32>} : memref<1x1xf32, #tpu.memory_space<vmem>>, vector<1x1xf32>,
    %c0_34 = arith.constant 0 : index
    %c0_35 = arith.constant 0 : index
    %51 = vector.load %arg13[%c0_34, %c0_35] : memref<1x1xf32, #tpu.memory_space<vmem>>, vector<1x1xf32>
    %52 = vector.shape_cast %42 : vector<8x1xf32> to vector<1x8x1xf32>
    %cst_36 = arith.constant dense<0xFF800000> : vector<1xf32>
    %53 = vector.multi_reduction <maximumf>, %52, %cst_36 [1, 2] : vector<1x8x1xf32> to vector<1xf32>
    %54 = vector.shape_cast %53 : vector<1xf32> to vector<1x1x1xf32>
    %55 = vector.extract %54[0, 0, 0] : f32 from vector<1x1x1xf32>
    %56 = vector.broadcast %55 : f32 to vector<1x1xf32>
    %57 = arith.maximumf %51, %56 : vector<1x1xf32>
    %c0_37 = arith.constant 0 : index
    %c0_38 = arith.constant 0 : index
    %58 = vector.load %arg14[%c0_37, %c0_38] : memref<1x1xf32, #tpu.memory_space<vmem>>, vector<1x1xf32>
    %59 = arith.subf %51, %57 : vector<1x1xf32>
    %60 = math.exp %59 : vector<1x1xf32>
    %61 = arith.mulf %58, %60 : vector<1x1xf32>
    %62 = vector.broadcast %57 : vector<1x1xf32> to vector<8x1xf32>
    %63 = arith.subf %42, %62 : vector<8x1xf32>
    %64 = math.exp %63 : vector<8x1xf32>
    %65 = vector.shape_cast %64 : vector<8x1xf32> to vector<1x8x1xf32>
    %cst_39 = arith.constant dense<0.000000e+00> : vector<1xf32>
    %66 = vector.multi_reduction <add>, %65, %cst_39 [1, 2] : vector<1x8x1xf32> to vector<1xf32>
    %67 = vector.shape_cast %66 : vector<1xf32> to vector<1x1x1xf32>
    %68 = vector.extract %67[0, 0, 0] : f32 from vector<1x1x1xf32>
    %69 = vector.broadcast %68 : f32 to vector<1x1xf32>
    %70 = arith.addf %61, %69 : vector<1x1xf32>
    %c0_40 = arith.constant 0 : index
    %c0_41 = arith.constant 0 : index
    %71 = vector.load %arg14[%c0_40, %c0_41] : memref<1x1xf32, #tpu.memory_space<vmem>>, vector<1x1xf32>
    tpu.vector_store %arg14[%c0_40, %c0_41], %70 {strides = array<i32>} : memref<1x1xf32, #tpu.memory_space<vmem>>, vector<1x1xf32>,
    %c0_42 = arith.constant 0 : index
    %c0_43 = arith.constant 0 : index
    %72 = vector.load %arg13[%c0_42, %c0_43] : memref<1x1xf32, #tpu.memory_space<vmem>>, vector<1x1xf32>
    tpu.vector_store %arg13[%c0_42, %c0_43], %57 {strides = array<i32>} : memref<1x1xf32, #tpu.memory_space<vmem>>, vector<1x1xf32>,
    %c0_i32_44 = arith.constant 0 : i32
    %73 = arith.cmpi eq, %arg0, %c0_i32_44 : i32
    %74 = arith.extui %73 : i1 to i32
    %c0_i32_45 = arith.constant 0 : i32
    %75 = arith.cmpi ne, %74, %c0_i32_45 : i32
    scf.if %75 {
      %c0_46 = arith.constant 0 : index
      %c0_47 = arith.constant 0 : index
      %76 = vector.load %arg12[%c0_46, %c0_47] : memref<1x1xf32, #tpu.memory_space<vmem>>, vector<1x1xf32>
      %77 = vector.shape_cast %76 : vector<1x1xf32> to vector<1x1x1xf32>
      %cst_48 = arith.constant dense<0.000000e+00> : vector<1xf32>
      %78 = vector.multi_reduction <add>, %77, %cst_48 [1, 2] : vector<1x1x1xf32> to vector<1xf32>
      %79 = vector.shape_cast %78 : vector<1xf32> to vector<1x1x1xf32>
      %80 = vector.extract %79[0, 0, 0] : f32 from vector<1x1x1xf32>
      %c0_49 = arith.constant 0 : index
      %81 = memref.load %arg11[%c0_49] : memref<2xf32, #tpu.memory_space<smem>>
      memref.store %80, %arg11[%c0_49] : memref<2xf32, #tpu.memory_space<smem>>
      %c0_50 = arith.constant 0 : index
      %c0_51 = arith.constant 0 : index
      %82 = vector.load %arg13[%c0_50, %c0_51] : memref<1x1xf32, #tpu.memory_space<vmem>>, vector<1x1xf32>
      %c0_52 = arith.constant 0 : index
      %c0_53 = arith.constant 0 : index
      %83 = vector.load %arg14[%c0_52, %c0_53] : memref<1x1xf32, #tpu.memory_space<vmem>>, vector<1x1xf32>
      %84 = math.log %83 : vector<1x1xf32>
      %85 = arith.addf %82, %84 : vector<1x1xf32>
      %86 = vector.shape_cast %85 : vector<1x1xf32> to vector<1x1x1xf32>
      %cst_54 = arith.constant dense<0.000000e+00> : vector<1xf32>
      %87 = vector.multi_reduction <add>, %86, %cst_54 [1, 2] : vector<1x1x1xf32> to vector<1xf32>
      %88 = vector.shape_cast %87 : vector<1xf32> to vector<1x1x1xf32>
      %89 = vector.extract %88[0, 0, 0] : f32 from vector<1x1x1xf32>
      %c1 = arith.constant 1 : index
      %90 = memref.load %arg11[%c1] : memref<2xf32, #tpu.memory_space<smem>>
      memref.store %89, %arg11[%c1] : memref<2xf32, #tpu.memory_space<smem>>
    } else {
    }
    return
  }
  func.func @transform_0(%arg0: i32) -> (i32, i32) {
    %c0_i32 = arith.constant 0 : i32
    %c0_i32_0 = arith.constant 0 : i32
    return %arg0, %c0_i32 : i32, i32
  }
  func.func @transform_1(%arg0: i32) -> (i32, i32) {
    %c0_i32 = arith.constant 0 : i32
    %c0_i32_0 = arith.constant 0 : i32
    return %arg0, %c0_i32 : i32, i32
  }
  func.func @transform_2(%arg0: i32) -> (i32, i32) {
    %c0_i32 = arith.constant 0 : i32
    %c0_i32_0 = arith.constant 0 : i32
    return %arg0, %c0_i32 : i32, i32
  }
  func.func @transform_3(%arg0: i32) -> (i32, i32) {
    %c0_i32 = arith.constant 0 : i32
    %c0_i32_0 = arith.constant 0 : i32
    %c0_i32_1 = arith.constant 0 : i32
    return %c0_i32, %c0_i32_0 : i32, i32
  }
  func.func @transform_4(%arg0: i32) -> (i32, i32) {
    %c0_i32 = arith.constant 0 : i32
    %c0_i32_0 = arith.constant 0 : i32
    %c0_i32_1 = arith.constant 0 : i32
    return %c0_i32, %c0_i32_0 : i32, i32
  }
  func.func @transform_5(%arg0: i32) -> (i32, i32) {
    %c0_i32 = arith.constant 0 : i32
    %c0_i32_0 = arith.constant 0 : i32
    %c0_i32_1 = arith.constant 0 : i32
    return %c0_i32, %c0_i32_0 : i32, i32
  }
  func.func @transform_6(%arg0: i32) -> (i32, i32) {
    %c0_i32 = arith.constant 0 : i32
    %c0_i32_0 = arith.constant 0 : i32
    %c0_i32_1 = arith.constant 0 : i32
    return %c0_i32, %c0_i32_0 : i32, i32
  }
  func.func @transform_7(%arg0: i32) -> (i32, i32) {
    %c0_i32 = arith.constant 0 : i32
    %c0_i32_0 = arith.constant 0 : i32
    %c0_i32_1 = arith.constant 0 : i32
    return %c0_i32, %c0_i32_0 : i32, i32
  }
  func.func @transform_8(%arg0: i32) -> (i32, i32) {
    %c0_i32 = arith.constant 0 : i32
    %c0_i32_0 = arith.constant 0 : i32
    %c0_i32_1 = arith.constant 0 : i32
    return %c0_i32, %c0_i32_0 : i32, i32
  }
  func.func @transform_9(%arg0: i32) -> (i32, i32) {
    %c0_i32 = arith.constant 0 : i32
    %c0_i32_0 = arith.constant 0 : i32
    %c0_i32_1 = arith.constant 0 : i32
    return %c0_i32, %c0_i32_0 : i32, i32
  }
  func.func @transform_10(%arg0: i32) -> i32 {
    %c0_i32 = arith.constant 0 : i32
    %c0_i32_0 = arith.constant 0 : i32
    return %c0_i32 : i32
  }
}

</mosaic_0001>

<llo_original>
// kernel: tpu_custom_call.1
$region0: #{tpu_custom_call.1}
  #allocation0 [shape = 'u32[]', space=smem, size = 0x4, offset = 0x4, fixed_abs, tag = 'smem constant byte address 0x4 - core index']
  #allocation1 [shape = 'u32[144,128]{1,0:T(1,128)}', space=vmem, size = 0x12000, scoped, tag = 'internal scratch']
  #allocation2 [shape = 'f32[1,1]{1,0:T(1,128)}', space=vmem, size = 0x200, scoped, tag = 'scratch operand']
  #allocation3 [shape = 'f32[1,1]{1,0:T(1,128)}', space=vmem, size = 0x200, scoped, tag = 'scratch operand']
  #allocation4 [shape = 'f32[1,1]{1,0:T(1,128)}', space=vmem, size = 0x200, scoped, tag = 'scratch operand']
  #allocation5 [shape = 'f32[1,1]{1,0:T(1,128)S(1)}', space=vmem, size = 0x200, scoped, tag = 'scoped memory for tpu_custom_call.1']
  %s0 = inlined_call_operand.hbm [shape: bf16[8,16], index: 0, kind: input, shape index: {}]
  %s1 = inlined_call_operand.hbm [shape: bf16[8,16], index: 1, kind: input, shape index: {}]
  %s2 = inlined_call_operand.hbm [shape: bf16[8,16], index: 2, kind: input, shape index: {}]
  %s3 = inlined_call_operand.hbm [shape: bf16[16,128], index: 3, kind: input, shape index: {}]
  %s4 = inlined_call_operand.vmem [shape: bf16[16,128], index: 4, kind: input, shape index: {}]
  %s5 = inlined_call_operand.vmem [shape: f32[1,128], index: 5, kind: input, shape index: {}]
  %s6 = inlined_call_operand.hbm [shape: bf16[128,128], index: 6, kind: input, shape index: {}]
  %s7 = inlined_call_operand.vmem [shape: f32[1,128], index: 7, kind: input, shape index: {}]
  %s8 = inlined_call_operand.vmem [shape: f32[1,128], index: 8, kind: input, shape index: {}]
  %s9 = inlined_call_operand.<no memory space> [shape: f32[1,1], index: 9, kind: input, shape index: {}]
  %s10 = inlined_call_operand.hbm [shape: f32[2], index: 10, kind: output, shape index: {}]
  %s11 = sld [smem:[#allocation0]]
  $region78: #{tpu_custom_call.1} parent=0
    _
  %s13 = ssub.s32 1, %s11
  %s14 = scalar_select 0, %s13, %s11
  %v15 = vstv %s9
  %16 = vst [vmem:[#allocation5] sm:$0x1] %v15
  $region1: #{tpu_custom_call.1} parent=0
    #allocation6 [shape = 'u8[2048]{0}', space=vmem, size = 0x800, scoped, tag = 'input window, operand 0, single buffered']
    #allocation7 [shape = 's32[1]{0}', space=sflag, size = 0x4, scoped, tag = 'scoped memory for tpu_custom_call.1']
    #allocation8 [shape = 's32[1]{0}', space=sflag, size = 0x4, scoped, tag = 'scoped memory for tpu_custom_call.1']
    #allocation9 [shape = 'u8[2048]{0}', space=vmem, size = 0x800, scoped, tag = 'input window, operand 1, single buffered']
    #allocation10 [shape = 's32[1]{0}', space=sflag, size = 0x4, scoped, tag = 'scoped memory for tpu_custom_call.1']
    #allocation11 [shape = 'u8[2048]{0}', space=vmem, size = 0x800, scoped, tag = 'input window, operand 2, single buffered']
    #allocation12 [shape = 'u8[4096]{0}', space=vmem, size = 0x1000, scoped, tag = 'input window, operand 3, single buffered']
    #allocation13 [shape = 's32[1]{0}', space=sflag, size = 0x4, scoped, tag = 'scoped memory for tpu_custom_call.1']
    #allocation14 [shape = 'u8[32768]{0}', space=vmem, size = 0x8000, scoped, tag = 'input window, operand 6, single buffered']
    #allocation15 [shape = 'u8[512]{0}', space=smem, size = 0x200, scoped, tag = 'output window, operand 0, single buffered']
    %17 = vsyncpa [#allocation7], 0
    %18 = vsyncpa [#allocation10], 0
    %19 = vsyncpa [#allocation13], 0
    %20 = vsyncpa [#allocation8], 0
    // Predicated region
    $region2: #{tpu_custom_call.1} parent=1 // pred_check
      _
    $region3: #{tpu_custom_call.1} parent=1 // pred_check_branch
      %22 = sbr.rel (0) target = $region5
    $region4: #{tpu_custom_call.1} parent=1 // pred_region
      %s24 = ssub.s32 64, 64
      %25 = vsyncadd [#allocation7], %s24
      %s27 = sshll.u32 [#allocation6], 4
      %s28 = int_to_ptr.vmem [resolvable:$true] %s27
      %30 = dma.hbm_to_vmem [thread:$0]  %s0, 64, %s28, [#allocation7]
    $region5: #{tpu_custom_call.1} parent=1 // pred_fallthru
      _
    // Predicated region
    $region6: #{tpu_custom_call.1} parent=1 // pred_check
      _
    $region7: #{tpu_custom_call.1} parent=1 // pred_check_branch
      %32 = sbr.rel (0) target = $region9
    $region8: #{tpu_custom_call.1} parent=1 // pred_region
      %s34 = ssub.s32 64, 64
      %35 = vsyncadd [#allocation10], %s34
      %s37 = sshll.u32 [#allocation9], 4
      %s38 = int_to_ptr.vmem [resolvable:$true] %s37
      %40 = dma.hbm_to_vmem [thread:$0]  %s1, 64, %s38, [#allocation10]
    $region9: #{tpu_custom_call.1} parent=1 // pred_fallthru
      _
    // Predicated region
    $region10: #{tpu_custom_call.1} parent=1 // pred_check
      _
    $region11: #{tpu_custom_call.1} parent=1 // pred_check_branch
      %42 = sbr.rel (0) target = $region13
    $region12: #{tpu_custom_call.1} parent=1 // pred_region
      %s44 = ssub.s32 64, 64
      %45 = vsyncadd [#allocation10], %s44
      %s47 = sshll.u32 [#allocation11], 4
      %s48 = int_to_ptr.vmem [resolvable:$true] %s47
      %50 = dma.hbm_to_vmem [thread:$0]  %s2, 64, %s48, [#allocation10]
    $region13: #{tpu_custom_call.1} parent=1 // pred_fallthru
      _
    // Predicated region
    $region14: #{tpu_custom_call.1} parent=1 // pred_check
      _
    $region15: #{tpu_custom_call.1} parent=1 // pred_check_branch
      %52 = sbr.rel (0) target = $region17
    $region16: #{tpu_custom_call.1} parent=1 // pred_region
      %s54 = ssub.s32 128, 128
      %55 = vsyncadd [#allocation13], %s54
      %s56 = sshll.u32 [#allocation12], 4
      %s57 = int_to_ptr.vmem [resolvable:$true] %s56
      %62 = dma.hbm_to_vmem [thread:$0]  %s3, 128, %s57, [#allocation13], 64, 64, 4
    $region17: #{tpu_custom_call.1} parent=1 // pred_fallthru
      _
    // Predicated region
    $region18: #{tpu_custom_call.1} parent=1 // pred_check
      _
    $region19: #{tpu_custom_call.1} parent=1 // pred_check_branch
      %64 = sbr.rel (0) target = $region21
    $region20: #{tpu_custom_call.1} parent=1 // pred_region
      _
    $region21: #{tpu_custom_call.1} parent=1 // pred_fallthru
      _
    // Predicated region
    $region22: #{tpu_custom_call.1} parent=1 // pred_check
      _
    $region23: #{tpu_custom_call.1} parent=1 // pred_check_branch
      %66 = sbr.rel (0) target = $region25
    $region24: #{tpu_custom_call.1} parent=1 // pred_region
      _
    $region25: #{tpu_custom_call.1} parent=1 // pred_fallthru
      _
    // Predicated region
    $region26: #{tpu_custom_call.1} parent=1 // pred_check
      _
    $region27: #{tpu_custom_call.1} parent=1 // pred_check_branch
      %68 = sbr.rel (0) target = $region29
    $region28: #{tpu_custom_call.1} parent=1 // pred_region
      %s70 = ssub.s32 1024, 1024
      %71 = vsyncadd [#allocation13], %s70
      %s72 = sshll.u32 [#allocation14], 4
      %s73 = int_to_ptr.vmem [resolvable:$true] %s72
      %78 = dma.hbm_to_vmem [thread:$0]  %s6, 1024, %s73, [#allocation13], 64, 64, 4
    $region29: #{tpu_custom_call.1} parent=1 // pred_fallthru
      _
    // Predicated region
    $region30: #{tpu_custom_call.1} parent=1 // pred_check
      _
    $region31: #{tpu_custom_call.1} parent=1 // pred_check_branch
      %80 = sbr.rel (0) target = $region33
    $region32: #{tpu_custom_call.1} parent=1 // pred_region
      _
    $region33: #{tpu_custom_call.1} parent=1 // pred_fallthru
      _
    // Predicated region
    $region34: #{tpu_custom_call.1} parent=1 // pred_check
      _
    $region35: #{tpu_custom_call.1} parent=1 // pred_check_branch
      %82 = sbr.rel (0) target = $region37
    $region36: #{tpu_custom_call.1} parent=1 // pred_region
      _
    $region37: #{tpu_custom_call.1} parent=1 // pred_fallthru
      _
    // Predicated region
    $region38: #{tpu_custom_call.1} parent=1 // pred_check
      _
    $region39: #{tpu_custom_call.1} parent=1 // pred_check_branch
      %84 = sbr.rel (0) target = $region41
    $region40: #{tpu_custom_call.1} parent=1 // pred_region
      _
    $region41: #{tpu_custom_call.1} parent=1 // pred_fallthru
      _
    // Predicated region
    $region42: #{tpu_custom_call.1} parent=1 // pred_check
      _
    $region43: #{tpu_custom_call.1} parent=1 // pred_check_branch
      %86 = sbr.rel (0) target = $region45
    $region44: #{tpu_custom_call.1} parent=1 // pred_region
      %87 = dma.done [#allocation7], 64
    $region45: #{tpu_custom_call.1} parent=1 // pred_fallthru
      _
    // Predicated region
    $region46: #{tpu_custom_call.1} parent=1 // pred_check
      _
    $region47: #{tpu_custom_call.1} parent=1 // pred_check_branch
      %89 = sbr.rel (0) target = $region49
    $region48: #{tpu_custom_call.1} parent=1 // pred_region
      %90 = dma.done [#allocation10], 64
    $region49: #{tpu_custom_call.1} parent=1 // pred_fallthru
      _
    // Predicated region
    $region50: #{tpu_custom_call.1} parent=1 // pred_check
      _
    $region51: #{tpu_custom_call.1} parent=1 // pred_check_branch
      %92 = sbr.rel (0) target = $region53
    $region52: #{tpu_custom_call.1} parent=1 // pred_region
      %93 = dma.done [#allocation10], 64
    $region53: #{tpu_custom_call.1} parent=1 // pred_fallthru
      _
    // Predicated region
    $region54: #{tpu_custom_call.1} parent=1 // pred_check
      _
    $region55: #{tpu_custom_call.1} parent=1 // pred_check_branch
      %95 = sbr.rel (0) target = $region57
    $region56: #{tpu_custom_call.1} parent=1 // pred_region
      %96 = dma.done [#allocation13], 128
    $region57: #{tpu_custom_call.1} parent=1 // pred_fallthru
      _
    // Predicated region
    $region58: #{tpu_custom_call.1} parent=1 // pred_check
      _
    $region59: #{tpu_custom_call.1} parent=1 // pred_check_branch
      %98 = sbr.rel (0) target = $region61
    $region60: #{tpu_custom_call.1} parent=1 // pred_region
      %99 = dma.done [#allocation13], 1024
    $region61: #{tpu_custom_call.1} parent=1 // pred_fallthru
      _
    %p101 = scmp.eq.s32.totalorder 0, 0
    // Predicated region
    $region62: #{tpu_custom_call.1} parent=1 // pred_check
      %p102 = pneg %p101
    $region63: #{tpu_custom_call.1} parent=1 // pred_check_branch
      %104 = sbr.rel (%p102) target = $region65
    $region64: #{tpu_custom_call.1} parent=1 // pred_region
      %vm105 = vcmask 0
      %106 = vst.msk [vmem:[#allocation2] sm:$0x1] %vm105, 0.0
      %107 = vst.msk [vmem:[#allocation3] sm:$0x1] %vm105, -inf
      %108 = vst.msk [vmem:[#allocation4] sm:$0x1] %vm105, 0.0
    $region65: #{tpu_custom_call.1} parent=1 // pred_fallthru
      _
    %v109 = vld [vmem:[#allocation6] sm:$0xf]
    %v110 = vld [vmem:[#allocation12] sm:$0xf]
    %v111 = vld [vmem:[#allocation12 + $0x4] sm:$0xf]
    %v114 = vunpack.c.l.b16 %v110
    %v115 = vunpack.c.l.b16 %v111
    %v116 = vpack.c.b16 %v115, %v114
    %vm118 = vcmask 130048
    %v120 = vsel %vm118, %v109, 0
    %122 = vmatprep.subr.bf16.mxu0 0
    %123 = vmatpush1.bf16.msra.mxu0 0
    %124 = vmatprep.subr.bf16.mxu0 0
    %125 = vmatpush1.bf16.msra.mxu0 0
    %126 = vmatprep.subr.bf16.mxu0 0
    %127 = vmatpush1.bf16.msra.mxu0 0
    %128 = vmatprep.subr.bf16.mxu0 0
    %129 = vmatpush1.bf16.msra.mxu0 0
    %130 = vmatprep.subr.bf16.mxu0 0
    %131 = vmatpush1.bf16.msra.mxu0 0
    %132 = vmatprep.subr.bf16.mxu0 0
    %133 = vmatpush1.bf16.msra.mxu0 0
    %134 = vmatprep.subr.bf16.mxu0 0
    %135 = vmatpush1.bf16.msra.mxu0 0
    %136 = vmatprep.subr.bf16.mxu0 0
    %137 = vmatpush1.bf16.msra.mxu0 %v116
    %138 = vmatprep.subr.bf16.mxu0 0
    %139 = vmatpush2.bf16.msra.mxu0 0
    %140 = vmatprep.subr.bf16.mxu0 0
    %141 = vmatpush2.bf16.msra.mxu0 0
    %142 = vmatprep.subr.bf16.mxu0 0
    %143 = vmatpush2.bf16.msra.mxu0 0
    %144 = vmatprep.subr.bf16.mxu0 0
    %145 = vmatpush2.bf16.msra.mxu0 0
    %146 = vmatprep.subr.bf16.mxu0 0
    %147 = vmatpush2.bf16.msra.mxu0 0
    %148 = vmatprep.subr.bf16.mxu0 0
    %149 = vmatpush2.bf16.msra.mxu0 0
    %150 = vmatprep.subr.bf16.mxu0 0
    %151 = vmatpush2.bf16.msra.mxu0 0
    %152 = vmatprep.subr.bf16.mxu0 0
    %153 = vmatpush2.bf16.msra.mxu0 0
    %154 = vmatprep.mubr.bf16.mxu0 0
    %155 = vmatmul.mubr.bf16.gmra.mxu0 %v120
    %v156 = vpop.f32.mrf.mxu0
    %v157 = vadd.f32 0.0, %v156
    %v158 = vpop.f32.mrf.mxu0
    %v159 = vpop.f32.mrf.mxu0
    %v160 = vpop.f32.mrf.mxu0
    %161 = vdwg.mxu0
    %v162 = vld [vmem:[#allocation9] sm:$0xf]
    %v163 = vld [vmem:[%s4] sm:$0xf]
    %v164 = vld [vmem:[%s4 + $0x4] sm:$0xf]
    %v167 = vunpack.c.l.b16 %v163
    %v168 = vunpack.c.l.b16 %v164
    %v169 = vpack.c.b16 %v168, %v167
    %v172 = vsel %vm118, %v162, 0
    %174 = vmatprep.subr.bf16.mxu0 0
    %175 = vmatpush1.bf16.msra.mxu0 0
    %176 = vmatprep.subr.bf16.mxu0 0
    %177 = vmatpush1.bf16.msra.mxu0 0
    %178 = vmatprep.subr.bf16.mxu0 0
    %179 = vmatpush1.bf16.msra.mxu0 0
    %180 = vmatprep.subr.bf16.mxu0 0
    %181 = vmatpush1.bf16.msra.mxu0 0
    %182 = vmatprep.subr.bf16.mxu0 0
    %183 = vmatpush1.bf16.msra.mxu0 0
    %184 = vmatprep.subr.bf16.mxu0 0
    %185 = vmatpush1.bf16.msra.mxu0 0
    %186 = vmatprep.subr.bf16.mxu0 0
    %187 = vmatpush1.bf16.msra.mxu0 0
    %188 = vmatprep.subr.bf16.mxu0 0
    %189 = vmatpush1.bf16.msra.mxu0 %v169
    %190 = vmatprep.subr.bf16.mxu0 0
    %191 = vmatpush2.bf16.msra.mxu0 0
    %192 = vmatprep.subr.bf16.mxu0 0
    %193 = vmatpush2.bf16.msra.mxu0 0
    %194 = vmatprep.subr.bf16.mxu0 0
    %195 = vmatpush2.bf16.msra.mxu0 0
    %196 = vmatprep.subr.bf16.mxu0 0
    %197 = vmatpush2.bf16.msra.mxu0 0
    %198 = vmatprep.subr.bf16.mxu0 0
    %199 = vmatpush2.bf16.msra.mxu0 0
    %200 = vmatprep.subr.bf16.mxu0 0
    %201 = vmatpush2.bf16.msra.mxu0 0
    %202 = vmatprep.subr.bf16.mxu0 0
    %203 = vmatpush2.bf16.msra.mxu0 0
    %204 = vmatprep.subr.bf16.mxu0 0
    %205 = vmatpush2.bf16.msra.mxu0 0
    %206 = vmatprep.mubr.bf16.mxu0 0
    %207 = vmatmul.mubr.bf16.gmra.mxu0 %v172
    %v208 = vpop.f32.mrf.mxu0
    %v209 = vadd.f32 0.0, %v208
    %v210 = vpop.f32.mrf.mxu0
    %v211 = vpop.f32.mrf.mxu0
    %v212 = vpop.f32.mrf.mxu0
    %213 = vdwg.mxu0
    %v214 = vld [vmem:[#allocation11] sm:$0xf]
    %v216 = vsel %vm118, %v214, 0
    %218 = vmatprep.subr.bf16.mxu0 0
    %219 = vmatpush1.bf16.msra.mxu0 0
    %220 = vmatprep.subr.bf16.mxu0 0
    %221 = vmatpush1.bf16.msra.mxu0 0
    %222 = vmatprep.subr.bf16.mxu0 0
    %223 = vmatpush1.bf16.msra.mxu0 0
    %224 = vmatprep.subr.bf16.mxu0 0
    %225 = vmatpush1.bf16.msra.mxu0 0
    %226 = vmatprep.subr.bf16.mxu0 0
    %227 = vmatpush1.bf16.msra.mxu0 0
    %228 = vmatprep.subr.bf16.mxu0 0
    %229 = vmatpush1.bf16.msra.mxu0 0
    %230 = vmatprep.subr.bf16.mxu0 0
    %231 = vmatpush1.bf16.msra.mxu0 0
    %232 = vmatprep.subr.bf16.mxu0 0
    %233 = vmatpush1.bf16.msra.mxu0 %v169
    %234 = vmatprep.subr.bf16.mxu0 0
    %235 = vmatpush2.bf16.msra.mxu0 0
    %236 = vmatprep.subr.bf16.mxu0 0
    %237 = vmatpush2.bf16.msra.mxu0 0
    %238 = vmatprep.subr.bf16.mxu0 0
    %239 = vmatpush2.bf16.msra.mxu0 0
    %240 = vmatprep.subr.bf16.mxu0 0
    %241 = vmatpush2.bf16.msra.mxu0 0
    %242 = vmatprep.subr.bf16.mxu0 0
    %243 = vmatpush2.bf16.msra.mxu0 0
    %244 = vmatprep.subr.bf16.mxu0 0
    %245 = vmatpush2.bf16.msra.mxu0 0
    %246 = vmatprep.subr.bf16.mxu0 0
    %247 = vmatpush2.bf16.msra.mxu0 0
    %248 = vmatprep.subr.bf16.mxu0 0
    %249 = vmatpush2.bf16.msra.mxu0 0
    %250 = vmatprep.mubr.bf16.mxu0 0
    %251 = vmatmul.mubr.bf16.gmra.mxu0 %v216
    %v252 = vpop.f32.mrf.mxu0
    %v253 = vadd.f32 0.0, %v252
    %v254 = vpop.f32.mrf.mxu0
    %v255 = vpop.f32.mrf.mxu0
    %v256 = vpop.f32.mrf.mxu0
    %257 = vdwg.mxu0
    %v258 = vld [vmem:[%s5] sm:$0x1]
    %v259 = vadd.f32 %v157, %v209
    %v261 = vlaneseq
    %v262 = vshrl.u32 %v261, 7
    %v263 = vsub.s32 0, %v262
    %v264 = vrot.slane %v258, %v263
    %v266 = vadd.f32 %v259, %v264
    %v267 = vmax.f32 %v266, 0.0
    %v268 = vpack.c.bf16 %v267, %v267
    %v269 = vadd.f32 %v157, %v253
    %v270 = vadd.f32 %v269, %v264
    %v271 = vmax.f32 %v270, 0.0
    %v272 = vpack.c.bf16 %v271, %v271
    %v274 = vrot.slane %v272, 4
    %vm275 = vcmask 1043456
    %v278 = vsel %vm275, %v268, %v274
    %v280 = vld [vmem:[#allocation14] sm:$0xf]
    %v281 = vld [vmem:[#allocation14 + $0x4] sm:$0xf]
    %v282 = vld [vmem:[#allocation14 + $0x8] sm:$0xf]
    %v283 = vld [vmem:[#allocation14 + $0xc] sm:$0xf]
    %v284 = vld [vmem:[#allocation14 + $0x10] sm:$0xf]
    %v285 = vld [vmem:[#allocation14 + $0x14] sm:$0xf]
    %v286 = vld [vmem:[#allocation14 + $0x18] sm:$0xf]
    %v287 = vld [vmem:[#allocation14 + $0x1c] sm:$0xf]
    %v288 = vld [vmem:[#allocation14 + $0x20] sm:$0xf]
    %v289 = vld [vmem:[#allocation14 + $0x24] sm:$0xf]
    %v290 = vld [vmem:[#allocation14 + $0x28] sm:$0xf]
    %v291 = vld [vmem:[#allocation14 + $0x2c] sm:$0xf]
    %v292 = vld [vmem:[#allocation14 + $0x30] sm:$0xf]
    %v293 = vld [vmem:[#allocation14 + $0x34] sm:$0xf]
    %v294 = vld [vmem:[#allocation14 + $0x38] sm:$0xf]
    %v295 = vld [vmem:[#allocation14 + $0x3c] sm:$0xf]
    %v296 = vld [vmem:[%s7] sm:$0x1]
    %v298 = vlaneseq
    %v299 = vshrl.u32 %v298, 7
    %v300 = vsub.s32 0, %v299
    %v301 = vrot.slane %v296, %v300
    %v319 = vunpack.c.l.b16 %v280
    %v320 = vunpack.c.l.b16 %v281
    %v321 = vunpack.c.l.b16 %v282
    %v322 = vunpack.c.l.b16 %v283
    %v323 = vunpack.c.l.b16 %v284
    %v324 = vunpack.c.l.b16 %v285
    %v325 = vunpack.c.l.b16 %v286
    %v326 = vunpack.c.l.b16 %v287
    %v327 = vunpack.c.l.b16 %v288
    %v328 = vunpack.c.l.b16 %v289
    %v329 = vunpack.c.l.b16 %v290
    %v330 = vunpack.c.l.b16 %v291
    %v331 = vunpack.c.l.b16 %v292
    %v332 = vunpack.c.l.b16 %v293
    %v333 = vunpack.c.l.b16 %v294
    %v334 = vunpack.c.l.b16 %v295
    %v335 = vpack.c.b16 %v320, %v319
    %v336 = vpack.c.b16 %v322, %v321
    %v337 = vpack.c.b16 %v324, %v323
    %v338 = vpack.c.b16 %v326, %v325
    %v339 = vpack.c.b16 %v328, %v327
    %v340 = vpack.c.b16 %v330, %v329
    %v341 = vpack.c.b16 %v332, %v331
    %v342 = vpack.c.b16 %v334, %v333
    %351 = vmatprep.subr.bf16.mxu0 0
    %352 = vmatpush1.bf16.msra.mxu0 %v342
    %353 = vmatprep.subr.bf16.mxu0 0
    %354 = vmatpush1.bf16.msra.mxu0 %v341
    %355 = vmatprep.subr.bf16.mxu0 0
    %356 = vmatpush1.bf16.msra.mxu0 %v340
    %357 = vmatprep.subr.bf16.mxu0 0
    %358 = vmatpush1.bf16.msra.mxu0 %v339
    %359 = vmatprep.subr.bf16.mxu0 0
    %360 = vmatpush1.bf16.msra.mxu0 %v338
    %361 = vmatprep.subr.bf16.mxu0 0
    %362 = vmatpush1.bf16.msra.mxu0 %v337
    %363 = vmatprep.subr.bf16.mxu0 0
    %364 = vmatpush1.bf16.msra.mxu0 %v336
    %365 = vmatprep.subr.bf16.mxu0 0
    %366 = vmatpush1.bf16.msra.mxu0 %v335
    %367 = vmatprep.subr.bf16.mxu0 0
    %368 = vmatpush2.bf16.msra.mxu0 0
    %369 = vmatprep.subr.bf16.mxu0 0
    %370 = vmatpush2.bf16.msra.mxu0 0
    %371 = vmatprep.subr.bf16.mxu0 0
    %372 = vmatpush2.bf16.msra.mxu0 0
    %373 = vmatprep.subr.bf16.mxu0 0
    %374 = vmatpush2.bf16.msra.mxu0 0
    %375 = vmatprep.subr.bf16.mxu0 0
    %376 = vmatpush2.bf16.msra.mxu0 0
    %377 = vmatprep.subr.bf16.mxu0 0
    %378 = vmatpush2.bf16.msra.mxu0 0
    %379 = vmatprep.subr.bf16.mxu0 0
    %380 = vmatpush2.bf16.msra.mxu0 0
    %381 = vmatprep.subr.bf16.mxu0 0
    %382 = vmatpush2.bf16.msra.mxu0 0
    %383 = vmatprep.mubr.bf16.mxu0 0
    %384 = vmatmul.mubr.bf16.gmra.mxu0 %v278
    %v385 = vpop.f32.mrf.mxu0
    %v386 = vadd.f32 %v301, %v385
    %v387 = vpop.f32.mrf.mxu0
    %v388 = vpop.f32.mrf.mxu0
    %v389 = vadd.f32 %v301, %v388
    %v390 = vpop.f32.mrf.mxu0
    %391 = vdwg.mxu0
    %v392 = vmax.f32 %v386, 0.0
    %v393 = vmax.f32 %v389, 0.0
    %v394 = vld [vmem:[%s8] sm:$0x1]
    %v396 = vlaneseq
    %v397 = vshrl.u32 %v396, 7
    %v398 = vsub.s32 0, %v397
    %v399 = vrot.slane %v394, %v398
    %v401 = vmul.f32 %v392, %v399
    %v402 = vmul.f32 %v393, %v399
    %403 = vadd.xlane.f32.xlu0 %v401
    %v404 = vpop.xlane.xlu0 %403
    %405 = vadd.xlane.f32.xlu0 %v402
    %v406 = vpop.xlane.xlu0 %405
    %v407 = vld [vmem:[#allocation5] sm:$0x1]
    %v409 = vlaneseq
    %v410 = vshrl.u32 %v409, 7
    %v411 = vsub.s32 0, %v410
    %v412 = vrot.slane %v407, %v411
    %v414 = vadd.f32 %v404, %v412
    %v415 = vadd.f32 %v406, %v412
    %v416 = vld [vmem:[#allocation2] sm:$0x1]
    %vm417 = vcmask 7168
    %v418 = vsel %vm417, %v414, 0.0
    %419 = vadd.xlane.f32.xlu0 %v418
    %v420 = vpop.xlane.xlu0 %419
    %v421 = vrot.slane %v420, 4
    %v422 = vadd.f32 %v420, %v421
    %v423 = vrot.slane %v422, 2
    %v424 = vadd.f32 %v422, %v423
    %v425 = vrot.slane %v424, 1
    %v426 = vadd.f32 %v424, %v425
    %s427 = vtos %v426
    %v428 = vstv %s427
    %v429 = vadd.f32 %v416, %v428
    %vm430 = vcmask 0
    %431 = vst.msk [vmem:[#allocation2] sm:$0x1] %vm430, %v429
    %v432 = vld [vmem:[#allocation3] sm:$0x1]
    %v433 = vsel %vm417, %v415, -inf
    %434 = vmax.xlane.f32.xlu0 %v433
    %v435 = vpop.xlane.xlu0 %434
    %v436 = vrot.slane %v435, 4
    %v437 = vmax.f32 %v435, %v436
    %v438 = vrot.slane %v437, 2
    %v439 = vmax.f32 %v437, %v438
    %v440 = vrot.slane %v439, 1
    %v441 = vmax.f32 %v439, %v440
    %s442 = vtos %v441
    %v443 = vstv %s442
    %v444 = vmax.f32 %v432, %v443
    %v445 = vld [vmem:[#allocation4] sm:$0x1]
    %v446 = vsub.f32 %v432, %v444
    %v447 = vmul.f32 %v446, 1.442695
    %v448 = vpow.pop %v447
    %v449 = vmul.f32 %v445, %v448
    %v451 = vlaneseq
    %v452 = vshrl.u32 %v451, 7
    %v453 = vsub.s32 0, %v452
    %v454 = vrot.slane %v444, %v453
    %v456 = vsub.f32 %v415, %v454
    %v457 = vmul.f32 %v456, 1.442695
    %v458 = vpow.pop %v457
    %v459 = vsel %vm417, %v458, 0.0
    %460 = vadd.xlane.f32.xlu0 %v459
    %v461 = vpop.xlane.xlu0 %460
    %v462 = vrot.slane %v461, 4
    %v463 = vadd.f32 %v461, %v462
    %v464 = vrot.slane %v463, 2
    %v465 = vadd.f32 %v463, %v464
    %v466 = vrot.slane %v465, 1
    %v467 = vadd.f32 %v465, %v466
    %s468 = vtos %v467
    %v469 = vstv %s468
    %v470 = vadd.f32 %v449, %v469
    %471 = vst.msk [vmem:[#allocation4] sm:$0x1] %vm430, %v470
    %472 = vst.msk [vmem:[#allocation3] sm:$0x1] %vm430, %v444
    // Predicated region
    $region66: #{tpu_custom_call.1} parent=1 // pred_check
      %p473 = pneg %p101
    $region67: #{tpu_custom_call.1} parent=1 // pred_check_branch
      %475 = sbr.rel (%p473) target = $region69
    $region68: #{tpu_custom_call.1} parent=1 // pred_region
      %v476 = vld [vmem:[#allocation2] sm:$0x1]
      %v477 = vadd.f32 %v476, 0.0
      %s478 = vtos %v477
      %s479 = scalar_lea.smem [#allocation15], 0
      %480 = sst [smem:[%s479]] %s478
      %v481 = vld [vmem:[#allocation3] sm:$0x1]
      %v482 = vld [vmem:[#allocation4] sm:$0x1]
      %v483 = vlog2.pop %v482
      %v484 = vmul.f32 %v483, 0.6931472
      %v485 = vadd.f32 %v481, %v484
      %v486 = vadd.f32 %v485, 0.0
      %s487 = vtos %v486
      %s488 = scalar_lea.smem [#allocation15], 1
      %489 = sst [smem:[%s488]] %s487
    $region69: #{tpu_custom_call.1} parent=1 // pred_fallthru
      _
    // Predicated region
    $region70: #{tpu_custom_call.1} parent=1 // pred_check
      _
    $region71: #{tpu_custom_call.1} parent=1 // pred_check_branch
      %491 = sbr.rel (0) target = $region73
    $region72: #{tpu_custom_call.1} parent=1 // pred_region
      %s493 = ssub.s32 16, 16
      %494 = vsyncadd [#allocation8], %s493
      %497 = dma.smem_to_hbm [#allocation15], 16, %s10, [#allocation8]
    $region73: #{tpu_custom_call.1} parent=1 // pred_fallthru
      _
    // Predicated region
    $region74: #{tpu_custom_call.1} parent=1 // pred_check
      _
    $region75: #{tpu_custom_call.1} parent=1 // pred_check_branch
      %499 = sbr.rel (0) target = $region77
    $region76: #{tpu_custom_call.1} parent=1 // pred_region
      %500 = dma.done [#allocation8], 16
    $region77: #{tpu_custom_call.1} parent=1 // pred_fallthru
      _
    %501 = sfence
    %502 = vsyncpa [#allocation7], 1
    %503 = vsyncpa [#allocation10], 1
    %504 = vsyncpa [#allocation13], 1
    %505 = vsyncpa [#allocation8], 1

</llo_original>
